<compile_context>
chip_gen: v7x
topology: tpu7x:2x2x1
jax: 0.10.0
libtpu: 0.0.40
codegen_flags: <defaults>
</compile_context>

<pallas_src>
import functools
import math

import numpy as np
import jax
import jax.numpy as jnp
from jax import lax
from jax.experimental import pallas as pl
from jax.experimental.pallas import tpu as pltpu


# ---------------------------------------------------------------------------
# Module "parameters" (deterministic, from __init__)
# ---------------------------------------------------------------------------
MAX_RES = 15.0
MIN_RES = 15.0 / 2000.0
DIV_FACTOR = 4

N_FREQUENCIES = int(math.log(MAX_RES / MIN_RES, DIV_FACTOR)) + 1          # = 6
EMB_DIM = 2 * N_FREQUENCIES                                               # = 12

# Host-side copy of the constant (used only by the pure-JAX reference; the
# kernel rebuilds the same f32 values in-kernel so it is never DMA'd).
FREQUENCIES = jnp.asarray(
    2.0 * math.pi * (float(DIV_FACTOR) ** np.arange(N_FREQUENCIES, dtype=np.float64))
    / MAX_RES,
    dtype=jnp.float32,
)


# ---------------------------------------------------------------------------
# Kernel: sqrt(x + 1e-8) * freqs  ->  rows [sin | cos], points on the lane axis
# ---------------------------------------------------------------------------
def _sinusoids_kernel(x_ref, out_ref):
    # x_ref:   (1, TN)   float32   -- TN points on the 128-lane axis
    # out_ref: (2F, TN)  float32   -- rows 0..F-1 = sin, rows F..2F-1 = cos
    s = jnp.sqrt(x_ref[...] + 1e-8)                                   # (1, TN)

    # Rebuild the module constant exactly in-kernel: f_k = 2*pi * 4**k / max_res.
    # (constant-folded by the compiler; avoids a second input stream)
    k = lax.broadcasted_iota(jnp.int32, (N_FREQUENCIES, 1), 0)        # (F, 1)
    pow4 = jnp.left_shift(jnp.int32(1), 2 * k).astype(jnp.float32)    # exact 4**k
    freq = (2.0 * math.pi) * pow4 / MAX_RES                           # (F, 1)

    emb = s * freq                                                    # (F, TN)
    out_ref[0:N_FREQUENCIES, :] = jnp.sin(emb)                        # sin half
    out_ref[N_FREQUENCIES:EMB_DIM, :] = jnp.cos(emb)                  # cos half


def _round_up(a, b):
    return ((a + b - 1) // b) * b


@functools.partial(jax.jit, static_argnames=("max_lanes_per_block",
                                             "vmem_limit_bytes"))
def sinusoids_embedding(x, *, max_lanes_per_block=65536,
                        vmem_limit_bytes=32 * 1024 * 1024):
    """x: (..., 1) -> (..., 2 * N_FREQUENCIES) float32 (matches the PyTorch module)."""
    x = jnp.asarray(x, jnp.float32)
    if x.ndim < 2 or x.shape[-1] != 1:
        raise ValueError("expected input of shape (..., 1)")
    lead_shape = x.shape[:-1]
    n = int(math.prod(lead_shape))

    x_flat = x.reshape(n)

    # Lane-dense tiling: N lives on the lane axis; pad N up so blocks divide it.
    lanes = min(int(max_lanes_per_block), _round_up(max(n, 1), 128))
    lanes = _round_up(lanes, 128)
    n_pad = _round_up(n, lanes)
    if n_pad != n:
        x_flat = jnp.pad(x_flat, (0, n_pad - n))      # zeros are numerically safe
    x2d = x_flat.reshape(1, n_pad)

    out2d = pl.pallas_call(
        _sinusoids_kernel,
        out_shape=jax.ShapeDtypeStruct((EMB_DIM, n_pad), jnp.float32),
        grid_spec=pltpu.PrefetchScalarGridSpec(
            num_scalar_prefetch=0,
            grid=(n_pad // lanes,),
            in_specs=[pl.BlockSpec((1, lanes), lambda i: (0, i))],
            out_specs=pl.BlockSpec((EMB_DIM, lanes), lambda i: (0, i)),
        ),
        compiler_params=pltpu.CompilerParams(
            dimension_semantics=("parallel",),
            vmem_limit_bytes=int(vmem_limit_bytes),
        ),
    )(x2d)

    # Back to the PyTorch layout (..., 2F): first half sin, second half cos.
    out = out2d[:, :n].T.reshape(*lead_shape, EMB_DIM)
    return out


# ---------------------------------------------------------------------------
# Pure-JAX reference (mirror of the PyTorch forward)
# ---------------------------------------------------------------------------
def sinusoids_embedding_ref(x):
    xs = jnp.sqrt(jnp.asarray(x, jnp.float32) + 1e-8)
    emb = xs * FREQUENCIES                       # (..., 1) * (F,) -> (..., F)
    return jnp.concatenate((jnp.sin(emb), jnp.cos(emb)), axis=-1)


if __name__ == "__main__":
    key = jax.random.PRNGKey(0)
    # Small, non-negative "squared distance"-like inputs, shape (N, 1).
    x = jax.random.uniform(key, (128, 1), dtype=jnp.float32, minval=0.0, maxval=1.0)

    out = jax.block_until_ready(sinusoids_embedding(x))
    ref = sinusoids_embedding_ref(x)
    assert out.shape == (128, EMB_DIM)
    assert jnp.allclose(out, ref, atol=2e-4, rtol=2e-4), \
        float(jnp.max(jnp.abs(out - ref)))

    # Exercise the padding path (N not a multiple of 128).
    x2 = jax.random.uniform(jax.random.PRNGKey(1), (33, 1), dtype=jnp.float32,
                            minval=0.0, maxval=1.0)
    out2 = jax.block_until_ready(sinusoids_embedding(x2))
    assert out2.shape == (33, EMB_DIM)
    assert jnp.allclose(out2, sinusoids_embedding_ref(x2), atol=2e-4, rtol=2e-4)

    # Exercise a multi-step grid with a small block override.
    x3 = jax.random.uniform(jax.random.PRNGKey(2), (300, 1), dtype=jnp.float32,
                            minval=0.0, maxval=1.0)
    out3 = jax.block_until_ready(sinusoids_embedding(x3, max_lanes_per_block=128))
    assert out3.shape == (300, EMB_DIM)
    assert jnp.allclose(out3, sinusoids_embedding_ref(x3), atol=2e-4, rtol=2e-4)

    print("KERNEL_OK")
</pallas_src>

<mosaic_0001>
module attributes {stable_mosaic.version = 11 : i64} {
  func.func @_sinusoids_kernel(%arg0: i32, %arg1: memref<1x128xf32, #tpu.memory_space<vmem>>, %arg2: memref<12x128xf32, #tpu.memory_space<vmem>>) attributes {dimension_semantics = [#tpu.dimension_semantics<parallel>], iteration_bounds = array<i64: 1>, scalar_prefetch = 0 : i64, scratch_operands = 0 : i64, tpu.core_type = #tpu.core_type<tc>, window_params = [{transform_indices = @transform_0, window_bounds = array<i64: 1, 128>}, {transform_indices = @transform_1, window_bounds = array<i64: 12, 128>}]} {
    %c0 = arith.constant 0 : index
    %c0_0 = arith.constant 0 : index
    %0 = vector.load %arg1[%c0, %c0_0] : memref<1x128xf32, #tpu.memory_space<vmem>>, vector<1x128xf32>
    %cst = arith.constant 9.99999993E-9 : f32
    %1 = vector.broadcast %cst : f32 to vector<1x128xf32>
    %2 = arith.addf %0, %1 : vector<1x128xf32>
    %3 = math.sqrt %2 : vector<1x128xf32>
    %4 = tpu.iota {dimensions = array<i32: 0>} : vector<6x1xi32>
    %c2_i32 = arith.constant 2 : i32
    %5 = vector.broadcast %c2_i32 : i32 to vector<6x1xi32>
    %6 = arith.muli %5, %4 : vector<6x1xi32>
    %c1_i32 = arith.constant 1 : i32
    %7 = vector.broadcast %c1_i32 : i32 to vector<6x1xi32>
    %8 = arith.shli %7, %6 : vector<6x1xi32>
    %9 = arith.sitofp %8 : vector<6x1xi32> to vector<6x1xf32>
    %cst_1 = arith.constant 6.28318548 : f32
    %10 = vector.broadcast %cst_1 : f32 to vector<6x1xf32>
    %11 = arith.mulf %10, %9 : vector<6x1xf32>
    %cst_2 = arith.constant 1.500000e+01 : f32
    %12 = vector.broadcast %cst_2 : f32 to vector<6x1xf32>
    %13 = arith.divf %11, %12 : vector<6x1xf32>
    %14 = vector.broadcast %3 : vector<1x128xf32> to vector<6x128xf32>
    %15 = vector.broadcast %13 : vector<6x1xf32> to vector<6x128xf32>
    %16 = arith.mulf %14, %15 : vector<6x128xf32>
    %17 = math.sin %16 : vector<6x128xf32>
    %c0_3 = arith.constant 0 : index
    %c0_4 = arith.constant 0 : index
    %18 = vector.load %arg2[%c0_3, %c0_4] : memref<12x128xf32, #tpu.memory_space<vmem>>, vector<6x128xf32>
    tpu.vector_store %arg2[%c0_3, %c0_4], %17 {strides = array<i32>} : memref<12x128xf32, #tpu.memory_space<vmem>>, vector<6x128xf32>,
    %19 = math.cos %16 : vector<6x128xf32>
    %c6 = arith.constant 6 : index
    %c0_5 = arith.constant 0 : index
    %20 = vector.load %arg2[%c6, %c0_5] : memref<12x128xf32, #tpu.memory_space<vmem>>, vector<6x128xf32>
    tpu.vector_store %arg2[%c6, %c0_5], %19 {strides = array<i32>} : memref<12x128xf32, #tpu.memory_space<vmem>>, vector<6x128xf32>,
    return
  }
  func.func @transform_0(%arg0: i32) -> (i32, i32) {
    %c0_i32 = arith.constant 0 : i32
    %c0_i32_0 = arith.constant 0 : i32
    return %c0_i32, %arg0 : i32, i32
  }
  func.func @transform_1(%arg0: i32) -> (i32, i32) {
    %c0_i32 = arith.constant 0 : i32
    %c0_i32_0 = arith.constant 0 : i32
    return %c0_i32, %arg0 : i32, i32
  }
}

</mosaic_0001>

<llo_original>
// kernel: sinusoids_embedding.1
$region0: #{sinusoids_embedding.1}
  #allocation0 [shape = 'u32[]', space=smem, size = 0x4, offset = 0x4, fixed_abs, tag = 'smem constant byte address 0x4 - core index']
  #allocation1 [shape = 'u32[144,128]{1,0:T(1,128)}', space=vmem, size = 0x12000, scoped, tag = 'internal scratch']
  %s0 = inlined_call_operand.vmem [shape: f32[1,128], index: 0, kind: input, shape index: {}]
  %s1 = inlined_call_operand.hbm [shape: f32[12,128], index: 1, kind: output, shape index: {}]
  %s2 = sld [smem:[#allocation0]]
  $region14: #{sinusoids_embedding.1} parent=0
    _
  %s4 = ssub.s32 1, %s2
  %s5 = scalar_select 0, %s4, %s2
  $region1: #{sinusoids_embedding.1} parent=0
    #allocation2 [shape = 'u8[8192]{0}', space=vmem, size = 0x2000, scoped, tag = 'output window, operand 0, single buffered']
    #allocation3 [shape = 's32[1]{0}', space=sflag, size = 0x4, scoped, tag = 'scoped memory for sinusoids_embedding.1']
    %6 = vsyncpa [#allocation3], 0
    // Predicated region
    $region2: #{sinusoids_embedding.1} parent=1 // pred_check
      _
    $region3: #{sinusoids_embedding.1} parent=1 // pred_check_branch
      %8 = sbr.rel (0) target = $region5
    $region4: #{sinusoids_embedding.1} parent=1 // pred_region
      _
    $region5: #{sinusoids_embedding.1} parent=1 // pred_fallthru
      _
    %v9 = vld [vmem:[%s0] sm:$0x1]
    %v10 = vadd.f32 %v9, 1e-08
    %v11 = vrsqrt.pop %v10
    %v12 = vmul.f32 %v10, %v11
    %vm13 = vcmp.eq.f32.partialorder %v10, inf
    %v14 = vsel %vm13, %v10, %v12
    %vm15 = vcmp.eq.f32.partialorder %v10, 0.0
    %v16 = vand.u32 %v10, 2147483648
    %v17 = vsel %vm15, %v16, %v14
    %v18 = vlaneseq
    %v19 = vshrl.u32 %v18, 7
    %v20 = vmul.u32 %v19, 2
    %v21 = vshll.u32 1, %v20
    %v22 = vcvt.s32.f32 %v21
    %v23 = vmul.f32 %v22, 6.2831855
    %v24 = vrcp.pop 15.0
    %v25 = vmul.f32 %v23, %v24
    %v27 = vlaneseq
    %v28 = vshrl.u32 %v27, 7
    %v29 = vsub.s32 0, %v28
    %v30 = vrot.slane %v17, %v29
    %v32 = vmul.f32 %v30, %v25
    %v33 = vand.u32 2147483647, %v32
    %vm34 = vcmp.le.f32.partialorder %v33, 0.7853982
    %vm35 = vcmp.lt.s32.totalorder %v32, 0
    %v36 = vand.u32 %v32, 2139095040
    %v37 = vshrl.u32 %v36, 23
    %v38 = vsub.s32 %v37, 127
    %v39 = vand.u32 2147483647, %v32
    %v40 = vand.u32 %v39, 8388607
    %v41 = vor.u32 %v40, 8388608
    %v42 = vsub.s32 0, %v41
    %v43 = vadd.s32 %v38, 1
    %vm44 = vcmp.gt.s32.totalorder %v43, 0
    %v45 = vsel %vm44, %v43, 0
    %v46 = vshrl.u32 %v45, 5
    %v47 = vand.u32 %v45, 31
    %v48 = vsub.s32 32, %v47
    %v49 = vshrl.u32 683565275, %v48
    %v50 = vshll.u32 683565275, %v47
    %v51 = vshrl.u32 2475754826, %v48
    %v52 = vor.u32 %v50, %v51
    %v53 = vshll.u32 2475754826, %v47
    %v54 = vshrl.u32 2131351028, %v48
    %v55 = vor.u32 %v53, %v54
    %v56 = vshll.u32 2131351028, %v47
    %v57 = vshrl.u32 2102212464, %v48
    %v58 = vor.u32 %v56, %v57
    %v59 = vshll.u32 2102212464, %v47
    %v60 = vshrl.u32 920167782, %v48
    %v61 = vor.u32 %v59, %v60
    %v62 = vshll.u32 920167782, %v47
    %v63 = vshrl.u32 1326507024, %v48
    %v64 = vor.u32 %v62, %v63
    %vm65 = vcmp.lt.s32.totalorder %v46, 1
    %vm66 = vcmp.lt.s32.totalorder %v46, 2
    %vm67 = vcmp.lt.s32.totalorder %v46, 3
    %vm68 = vcmp.lt.s32.totalorder %v46, 4
    %v69 = vsel %vm65, %v49, %v52
    %v70 = vsel %vm68, %v58, 2102212464
    %v71 = vsel %vm67, %v55, %v70
    %v72 = vsel %vm66, %v69, %v71
    %v73 = vsel %vm65, %v52, %v55
    %v74 = vsel %vm68, %v61, 920167782
    %v75 = vsel %vm67, %v58, %v74
    %v76 = vsel %vm66, %v73, %v75
    %v77 = vsel %vm65, %v55, %v58
    %v78 = vsel %vm68, %v64, 1326507024
    %v79 = vsel %vm67, %v61, %v78
    %v80 = vsel %vm66, %v77, %v79
    %v81 = vshll.u32 %v41, 8
    %v82 = vmul.u32.u64.compose %v81, %v80
    %v83 = vextract.low.u32 %v82
    %v84 = vextract.high.u32 %v82
    %v85 = vmul.u32.u64.compose %v81, %v76
    %v86 = vextract.low.u32 %v85
    %v87 = vextract.high.u32 %v85
    %v88 = vmul.u32 %v81, %v72
    %v89 = vadd.s32 %v84, %v86
    %vm90 = vc.u32 %v84, %v86
    %v91 = vadd.s32 %v87, 1
    %v92 = vsel %vm90, %v91, %v87
    %v93 = vadd.s32 %v88, %v92
    %v94 = vadd.s32 %v93, 536870912
    %v95 = vshrl.u32 %v94, 30
    %v96 = vshll.u32 %v95, 30
    %v97 = vsub.s32 %v93, %v96
    %vm98 = vcmp.lt.s32.totalorder %v97, 0
    %v99 = vsub.s32 0, %v97
    %v100 = vsel %vm98, %v99, %v97
    %v101 = vclz %v100
    %v102 = vsub.s32 %v101, 2
    %vm103 = vcmp.gt.s32.totalorder 0, %v102
    %v104 = vsel %vm103, 0, %v102
    %v105 = vsub.s32 32, %v104
    %v106 = vshll.u32 %v97, %v104
    %v107 = vshrl.u32 %v89, %v105
    %v108 = vor.u32 %v106, %v107
    %v109 = vsub.s32 4294967266, %v104
    %v110 = vadd.s32 %v109, 127
    %v111 = vshll.u32 %v110, 23
    %v112 = vor.u32 4788187, %v111
    %v113 = vand.u32 2147483647, %v112
    %v115 = vcvt.s32.f32 %v108
    %v116 = vmul.f32 %v115, %v113
    %v117 = vxor.u32 %v116, 2147483648
    %v118 = vsel %vm35, %v117, %v116
    %v119 = vsub.s32 4, %v95
    %v120 = vsel %vm35, %v119, %v95
    %v121 = vsel %vm34, %v32, %v118
    %v122 = vsel %vm34, 0, %v120
    %v123 = vcosq.f32.pop %v121
    %v124 = vsinq.f32.pop %v121
    %vm125 = vweird.f32 %v32
    %v126 = vadd.s32 %v122, 3
    %v127 = vand.u32 %v126, 3
    %vm128 = vcmp.lt.s32.totalorder %v127, 2
    %vm129 = vcmp.eq.s32.totalorder %v127, 0
    %v130 = vxor.u32 %v124, 2147483648
    %v131 = vsel %vm129, %v123, %v130
    %vm132 = vcmp.eq.s32.totalorder %v127, 2
    %v133 = vxor.u32 %v123, 2147483648
    %v134 = vsel %vm132, %v133, %v124
    %v135 = vsel %vm128, %v131, %v134
    %v136 = vsel %vm125, nan, %v135
    %137 = vst [vmem:[#allocation2] sm:$0x3f] %v136
    %v138 = vand.u32 2147483647, %v32
    %vm139 = vcmp.le.f32.partialorder %v138, 0.7853982
    %vm140 = vcmp.lt.s32.totalorder %v32, 0
    %v141 = vand.u32 %v32, 2139095040
    %v142 = vshrl.u32 %v141, 23
    %v143 = vsub.s32 %v142, 127
    %v144 = vand.u32 2147483647, %v32
    %v145 = vand.u32 %v144, 8388607
    %v146 = vor.u32 %v145, 8388608
    %v147 = vsub.s32 0, %v146
    %v148 = vadd.s32 %v143, 1
    %vm149 = vcmp.gt.s32.totalorder %v148, 0
    %v150 = vsel %vm149, %v148, 0
    %v151 = vshrl.u32 %v150, 5
    %v152 = vand.u32 %v150, 31
    %v153 = vsub.s32 32, %v152
    %v154 = vshrl.u32 683565275, %v153
    %v155 = vshll.u32 683565275, %v152
    %v156 = vshrl.u32 2475754826, %v153
    %v157 = vor.u32 %v155, %v156
    %v158 = vshll.u32 2475754826, %v152
    %v159 = vshrl.u32 2131351028, %v153
    %v160 = vor.u32 %v158, %v159
    %v161 = vshll.u32 2131351028, %v152
    %v162 = vshrl.u32 2102212464, %v153
    %v163 = vor.u32 %v161, %v162
    %v164 = vshll.u32 2102212464, %v152
    %v165 = vshrl.u32 920167782, %v153
    %v166 = vor.u32 %v164, %v165
    %v167 = vshll.u32 920167782, %v152
    %v168 = vshrl.u32 1326507024, %v153
    %v169 = vor.u32 %v167, %v168
    %vm170 = vcmp.lt.s32.totalorder %v151, 1
    %vm171 = vcmp.lt.s32.totalorder %v151, 2
    %vm172 = vcmp.lt.s32.totalorder %v151, 3
    %vm173 = vcmp.lt.s32.totalorder %v151, 4
    %v174 = vsel %vm170, %v154, %v157
    %v175 = vsel %vm173, %v163, 2102212464
    %v176 = vsel %vm172, %v160, %v175
    %v177 = vsel %vm171, %v174, %v176
    %v178 = vsel %vm170, %v157, %v160
    %v179 = vsel %vm173, %v166, 920167782
    %v180 = vsel %vm172, %v163, %v179
    %v181 = vsel %vm171, %v178, %v180
    %v182 = vsel %vm170, %v160, %v163
    %v183 = vsel %vm173, %v169, 1326507024
    %v184 = vsel %vm172, %v166, %v183
    %v185 = vsel %vm171, %v182, %v184
    %v186 = vshll.u32 %v146, 8
    %v187 = vmul.u32.u64.compose %v186, %v185
    %v188 = vextract.low.u32 %v187
    %v189 = vextract.high.u32 %v187
    %v190 = vmul.u32.u64.compose %v186, %v181
    %v191 = vextract.low.u32 %v190
    %v192 = vextract.high.u32 %v190
    %v193 = vmul.u32 %v186, %v177
    %v194 = vadd.s32 %v189, %v191
    %vm195 = vc.u32 %v189, %v191
    %v196 = vadd.s32 %v192, 1
    %v197 = vsel %vm195, %v196, %v192
    %v198 = vadd.s32 %v193, %v197
    %v199 = vadd.s32 %v198, 536870912
    %v200 = vshrl.u32 %v199, 30
    %v201 = vshll.u32 %v200, 30
    %v202 = vsub.s32 %v198, %v201
    %vm203 = vcmp.lt.s32.totalorder %v202, 0
    %v204 = vsub.s32 0, %v202
    %v205 = vsel %vm203, %v204, %v202
    %v206 = vclz %v205
    %v207 = vsub.s32 %v206, 2
    %vm208 = vcmp.gt.s32.totalorder 0, %v207
    %v209 = vsel %vm208, 0, %v207
    %v210 = vsub.s32 32, %v209
    %v211 = vshll.u32 %v202, %v209
    %v212 = vshrl.u32 %v194, %v210
    %v213 = vor.u32 %v211, %v212
    %v214 = vsub.s32 4294967266, %v209
    %v215 = vadd.s32 %v214, 127
    %v216 = vshll.u32 %v215, 23
    %v217 = vor.u32 4788187, %v216
    %v218 = vand.u32 2147483647, %v217
    %v220 = vcvt.s32.f32 %v213
    %v221 = vmul.f32 %v220, %v218
    %v222 = vxor.u32 %v221, 2147483648
    %v223 = vsel %vm140, %v222, %v221
    %v224 = vsub.s32 4, %v200
    %v225 = vsel %vm140, %v224, %v200
    %v226 = vsel %vm139, %v32, %v223
    %v227 = vsel %vm139, 0, %v225
    %v228 = vcosq.f32.pop %v226
    %v229 = vsinq.f32.pop %v226
    %vm230 = vweird.f32 %v32
    %v231 = vand.u32 %v227, 3
    %vm232 = vcmp.lt.s32.totalorder %v231, 2
    %vm233 = vcmp.eq.s32.totalorder %v231, 0
    %v234 = vxor.u32 %v229, 2147483648
    %v235 = vsel %vm233, %v228, %v234
    %vm236 = vcmp.eq.s32.totalorder %v231, 2
    %v237 = vxor.u32 %v228, 2147483648
    %v238 = vsel %vm236, %v237, %v229
    %v239 = vsel %vm232, %v235, %v238
    %v240 = vsel %vm230, nan, %v239
    %241 = vst [vmem:[#allocation2 + $0x6] sm:$0x3f] %v240
    // Predicated region
    $region6: #{sinusoids_embedding.1} parent=1 // pred_check
      _
    $region7: #{sinusoids_embedding.1} parent=1 // pred_check_branch
      %243 = sbr.rel (0) target = $region9
    $region8: #{sinusoids_embedding.1} parent=1 // pred_region
      %s245 = ssub.s32 256, 256
      %246 = vsyncadd [#allocation3], %s245
      %s247 = sshll.u32 [#allocation2], 4
      %s248 = int_to_ptr.vmem [resolvable:$true] %s247
      %253 = dma.vmem_to_hbm [thread:$0]  %s248, 256, %s1, [#allocation3], 128, 128, 8
    $region9: #{sinusoids_embedding.1} parent=1 // pred_fallthru
      _
    // Predicated region
    $region10: #{sinusoids_embedding.1} parent=1 // pred_check
      _
    $region11: #{sinusoids_embedding.1} parent=1 // pred_check_branch
      %255 = sbr.rel (0) target = $region13
    $region12: #{sinusoids_embedding.1} parent=1 // pred_region
      %256 = dma.done [#allocation3], 256
    $region13: #{sinusoids_embedding.1} parent=1 // pred_fallthru
      _
    %257 = vsyncpa [#allocation3], 1

</llo_original>
